<compile_context>
chip_gen: v6e
topology: v6e:2x2x1
jax: 0.10.0
libtpu: 0.0.40
codegen_flags: <defaults>
</compile_context>

<pallas_src>
import functools

import jax
import jax.numpy as jnp
from jax.experimental import pallas as pl
from jax.experimental.pallas import tpu as pltpu


def _dc_kernel(x_ref, ks_ref, mask_ref, fh2_ref, gw2_ref, gwi_ref,
               img_ref, ksp_ref, a_ref, *, compute_dtype):
    """Per-batch data consistency: packed DFT -> mask mix -> packed inverse DFT."""
    dot = functools.partial(jnp.dot, preferred_element_type=jnp.float32)
    cast = lambda v: v.astype(compute_dtype)

    x = x_ref[...]            # [H, W]   real image
    ks = ks_ref[...]          # [H, 2W]  measured k-space, [re | im] lane-packed
    m = mask_ref[...]         # [H, W]   undersampling mask (shared across batch,
                              #          exactly like the module's single self.us_mask)
    fh2 = fh2_ref[...]        # [2H, H]  = [C_H ; S_H]
    gw2 = gw2_ref[...]        # [W, 2W]  = [C_W | S_W]
    gwi = gwi_ref[...]        # [2W, W]  = [C_W ; -S_W]
    H, W = x.shape

    # ---- forward ortho 2-D DFT: 2 packed MXU matmuls -------------------------
    t = dot(cast(fh2), cast(x))            # [2H, W]  = [C_H x ; S_H x]
    t2 = dot(cast(t), cast(gw2))           # [2H, 2W] = all four C/S blocks
    kp_re = t2[:H, :W] - t2[H:, W:]        # C x C - S x S
    kp_im = -(t2[:H, W:] + t2[H:, :W])     # -(C x S + S x C)

    # ---- data consistency: up = kp + m*(ks - kp)  (== m*ks + (1-m)*kp) -------
    up_re = kp_re + m * (ks[:, :W] - kp_re)
    up_im = kp_im + m * (ks[:, W:] - kp_im)

    # Lane-dense packed k-space output; it is also the [up_re | up_im] operand
    # of the first inverse matmul (no extra concat / scratch copy).
    ksp_ref[:, :W] = up_re
    ksp_ref[:, W:] = up_im

    # ---- inverse ortho 2-D DFT (real part): 2 packed MXU matmuls -------------
    s = dot(cast(fh2), cast(ksp_ref[...])) # [2H, 2W]
    a_ref[:, :W] = s[:H, :W] - s[H:, W:]   # a_re = C up_re - S up_im
    a_ref[:, W:] = s[:H, W:] + s[H:, :W]   # a_im = C up_im + S up_re
    img_ref[...] = dot(cast(a_ref[...]), cast(gwi)).astype(img_ref.dtype)


def _dft_mats(n):
    """Ortho-normalized real/imag parts of the symmetric n x n DFT matrix."""
    k = jnp.arange(n, dtype=jnp.float32)
    ang = 2.0 * jnp.pi * jnp.outer(k, k) / n
    scale = 1.0 / jnp.sqrt(jnp.asarray(n, jnp.float32))
    return (jnp.cos(ang) * scale).astype(jnp.float32), \
           (jnp.sin(ang) * scale).astype(jnp.float32)


def data_consistency_layer(predicted_img, us_kspace, us_mask, *, use_bf16_mxu=False):
    """predicted_img: [B, C, H, W]; us_kspace: [B, 1, H, W, 2]; us_mask: broadcastable
    single mask with H*W elements (e.g. [1,1,H,W,1] or [1,H,W,1]).

    Returns (update_img_abs [B,1,H,W] f32, updated_kspace [B,H,W,2] f32),
    matching the PyTorch module's forward (kspace_flag=False path).

    use_bf16_mxu: cast matmul inputs to bf16 (f32 accumulate) — ~3x faster DFTs
    on v6e/v7x MXUs, with ~1e-3-level relative error; keep False when exact-f32
    accuracy is required.
    """
    B, _, H, W = predicted_img.shape
    x = predicted_img[:, 0, :, :].astype(jnp.float32)                         # [B, H, W]
    # Lane-dense packed measured k-space: re in lanes [0,W), im in [W,2W).
    ks2 = jnp.concatenate(
        [us_kspace[:, 0, :, :, 0], us_kspace[:, 0, :, :, 1]], axis=-1
    ).astype(jnp.float32)                                                     # [B, H, 2W]
    mask = jnp.reshape(us_mask.astype(jnp.float32), (H, W))                   # single mask

    ch, sh = _dft_mats(H)
    cw, sw = _dft_mats(W)
    fh2 = jnp.concatenate([ch, sh], axis=0)       # [2H, H]
    gw2 = jnp.concatenate([cw, sw], axis=1)       # [W, 2W]
    gwi = jnp.concatenate([cw, -sw], axis=0)      # [2W, W]

    per_img = pl.BlockSpec((None, H, W), lambda b: (b, 0, 0))
    per_ksp = pl.BlockSpec((None, H, 2 * W), lambda b: (b, 0, 0))
    # Grid-invariant operands: constant index map -> fetched once by the pipeline.
    const_mask = pl.BlockSpec((H, W), lambda b: (0, 0))
    const_fh2 = pl.BlockSpec((2 * H, H), lambda b: (0, 0))
    const_gw2 = pl.BlockSpec((W, 2 * W), lambda b: (0, 0))
    const_gwi = pl.BlockSpec((2 * W, W), lambda b: (0, 0))

    # 4 packed matmuls per image: 2*(2H*H*W) + 2*(2H*W*2W) + 2*(2H*H*2W) + 2*(H*2W*W)
    flops = int(B) * (12 * H * H * W + 12 * H * W * W)
    bytes_accessed = 4 * (6 * B * H * W + H * W + 2 * H * H + 4 * W * W)

    kernel = functools.partial(
        _dc_kernel,
        compute_dtype=jnp.bfloat16 if use_bf16_mxu else jnp.float32)

    img, ksp2 = pl.pallas_call(
        kernel,
        out_shape=(jax.ShapeDtypeStruct((B, H, W), jnp.float32),
                   jax.ShapeDtypeStruct((B, H, 2 * W), jnp.float32)),
        grid_spec=pltpu.PrefetchScalarGridSpec(
            num_scalar_prefetch=0,
            grid=(B,),
            in_specs=[per_img, per_ksp, const_mask,
                      const_fh2, const_gw2, const_gwi],
            out_specs=(per_img, per_ksp),
            scratch_shapes=[pltpu.VMEM((H, 2 * W), jnp.float32)]),
        compiler_params=pltpu.CompilerParams(
            dimension_semantics=("parallel",)),
        cost_estimate=pl.CostEstimate(flops=flops, transcendentals=0,
                                      bytes_accessed=bytes_accessed),
    )(x, ks2, mask, fh2, gw2, gwi)

    update_img_abs = img[:, None, :, :]                                # [B, 1, H, W]
    # Single small transpose to the module-mandated [..., 2] innermost layout
    # (replaces the previous strided jnp.stack interleave of two planes).
    updated_kspace = jnp.transpose(ksp2.reshape(B, H, 2, W), (0, 1, 3, 2))  # [B, H, W, 2]
    return update_img_abs, updated_kspace


if __name__ == "__main__":
    key = jax.random.PRNGKey(0)
    k1, k2, k3 = jax.random.split(key, 3)
    B, H, W = 2, 16, 16

    predicted_img = jax.random.normal(k1, (B, 1, H, W), dtype=jnp.float32)
    us_kspace = jax.random.normal(k2, (B, 1, H, W, 2), dtype=jnp.float32)
    us_mask = (jax.random.uniform(k3, (1, 1, H, W, 1)) < 0.33).astype(jnp.float32)

    img_out, ksp_out = data_consistency_layer(predicted_img, us_kspace, us_mask)
    jax.block_until_ready((img_out, ksp_out))

    # Reference via jnp.fft (ortho norm == torch.rfft/ifft with normalized=True).
    x = predicted_img[:, 0].astype(jnp.float32)
    kp = jnp.fft.fft2(x, norm="ortho")
    m = us_mask[0, 0, :, :, 0]
    meas = us_kspace[:, 0, :, :, 0] + 1j * us_kspace[:, 0, :, :, 1]
    up = m * meas + (1.0 - m) * kp
    img_ref = jnp.real(jnp.fft.ifft2(up, norm="ortho"))[:, None]

    assert img_out.shape == (B, 1, H, W) and img_out.dtype == jnp.float32
    assert ksp_out.shape == (B, H, W, 2) and ksp_out.dtype == jnp.float32
    assert jnp.allclose(img_out, img_ref, atol=1e-2), "image mismatch vs FFT reference"
    assert jnp.allclose(ksp_out[..., 0], jnp.real(up), atol=1e-2), "kspace(re) mismatch"
    assert jnp.allclose(ksp_out[..., 1], jnp.imag(up), atol=1e-2), "kspace(im) mismatch"

    # bf16-MXU fast path (v6e/v7x): verify it compiles/runs and produces finite output.
    img_bf16, ksp_bf16 = data_consistency_layer(
        predicted_img, us_kspace, us_mask, use_bf16_mxu=True)
    jax.block_until_ready((img_bf16, ksp_bf16))
    assert img_bf16.shape == (B, 1, H, W) and ksp_bf16.shape == (B, H, W, 2)
    assert bool(jnp.all(jnp.isfinite(img_bf16))) and bool(jnp.all(jnp.isfinite(ksp_bf16)))

    print("KERNEL_OK")
</pallas_src>

<mosaic_0001>
module attributes {stable_mosaic.version = 11 : i64} {
  func.func @_dc_kernel(%arg0: i32, %arg1: memref<1x16x16xf32, #tpu.memory_space<vmem>>, %arg2: memref<1x16x32xf32, #tpu.memory_space<vmem>>, %arg3: memref<16x16xf32, #tpu.memory_space<vmem>>, %arg4: memref<32x16xf32, #tpu.memory_space<vmem>>, %arg5: memref<16x32xf32, #tpu.memory_space<vmem>>, %arg6: memref<32x16xf32, #tpu.memory_space<vmem>>, %arg7: memref<1x16x16xf32, #tpu.memory_space<vmem>>, %arg8: memref<1x16x32xf32, #tpu.memory_space<vmem>>, %arg9: memref<16x32xf32, #tpu.memory_space<vmem>>) attributes {dimension_semantics = [#tpu.dimension_semantics<parallel>], iteration_bounds = array<i64: 2>, scalar_prefetch = 0 : i64, scratch_operands = 1 : i64, tpu.core_type = #tpu.core_type<tc>, window_params = [{transform_indices = @transform_0, window_bounds = array<i64: 1, 16, 16>}, {transform_indices = @transform_1, window_bounds = array<i64: 1, 16, 32>}, {pipeline_mode = #tpu.pipeline_mode<synchronous>, transform_indices = @transform_2, window_bounds = array<i64: 16, 16>}, {pipeline_mode = #tpu.pipeline_mode<synchronous>, transform_indices = @transform_3, window_bounds = array<i64: 32, 16>}, {pipeline_mode = #tpu.pipeline_mode<synchronous>, transform_indices = @transform_4, window_bounds = array<i64: 16, 32>}, {pipeline_mode = #tpu.pipeline_mode<synchronous>, transform_indices = @transform_5, window_bounds = array<i64: 32, 16>}, {transform_indices = @transform_6, window_bounds = array<i64: 1, 16, 16>}, {transform_indices = @transform_7, window_bounds = array<i64: 1, 16, 32>}]} {
    %c0 = arith.constant 0 : index
    %c0_0 = arith.constant 0 : index
    %c0_1 = arith.constant 0 : index
    %0 = vector.load %arg1[%c0, %c0_0, %c0_1] : memref<1x16x16xf32, #tpu.memory_space<vmem>>, vector<1x16x16xf32>
    %1 = vector.shape_cast %0 : vector<1x16x16xf32> to vector<16x16xf32>
    %c0_2 = arith.constant 0 : index
    %c0_3 = arith.constant 0 : index
    %c0_4 = arith.constant 0 : index
    %2 = vector.load %arg2[%c0_2, %c0_3, %c0_4] : memref<1x16x32xf32, #tpu.memory_space<vmem>>, vector<1x16x32xf32>
    %3 = vector.shape_cast %2 : vector<1x16x32xf32> to vector<16x32xf32>
    %c0_5 = arith.constant 0 : index
    %c0_6 = arith.constant 0 : index
    %4 = vector.load %arg3[%c0_5, %c0_6] : memref<16x16xf32, #tpu.memory_space<vmem>>, vector<16x16xf32>
    %c0_7 = arith.constant 0 : index
    %c0_8 = arith.constant 0 : index
    %5 = vector.load %arg4[%c0_7, %c0_8] : memref<32x16xf32, #tpu.memory_space<vmem>>, vector<32x16xf32>
    %c0_9 = arith.constant 0 : index
    %c0_10 = arith.constant 0 : index
    %6 = vector.load %arg5[%c0_9, %c0_10] : memref<16x32xf32, #tpu.memory_space<vmem>>, vector<16x32xf32>
    %c0_11 = arith.constant 0 : index
    %c0_12 = arith.constant 0 : index
    %7 = vector.load %arg6[%c0_11, %c0_12] : memref<32x16xf32, #tpu.memory_space<vmem>>, vector<32x16xf32>
    %cst = arith.constant dense<0.000000e+00> : vector<32x16xf32>
    %8 = tpu.matmul %5, %1, %cst {dimension_numbers = #tpu.dot_dimension_numbers<[1], [0], [0], [1], [0, 0, 1, 1], [], []>} : vector<32x16xf32>, vector<16x16xf32>, vector<32x16xf32> -> vector<32x16xf32>
    %cst_13 = arith.constant dense<0.000000e+00> : vector<32x32xf32>
    %9 = tpu.matmul %8, %6, %cst_13 {dimension_numbers = #tpu.dot_dimension_numbers<[1], [0], [0], [1], [0, 0, 1, 1], [], []>} : vector<32x16xf32>, vector<16x32xf32>, vector<32x32xf32> -> vector<32x32xf32>
    %10 = vector.extract_strided_slice %9 {offsets = [0, 0], sizes = [16, 16], strides = [1, 1]} : vector<32x32xf32> to vector<16x16xf32>
    %11 = vector.extract_strided_slice %9 {offsets = [16, 16], sizes = [16, 16], strides = [1, 1]} : vector<32x32xf32> to vector<16x16xf32>
    %12 = arith.subf %10, %11 : vector<16x16xf32>
    %13 = vector.extract_strided_slice %9 {offsets = [0, 16], sizes = [16, 16], strides = [1, 1]} : vector<32x32xf32> to vector<16x16xf32>
    %14 = vector.extract_strided_slice %9 {offsets = [16, 0], sizes = [16, 16], strides = [1, 1]} : vector<32x32xf32> to vector<16x16xf32>
    %15 = arith.addf %13, %14 : vector<16x16xf32>
    %cst_14 = arith.constant 0.000000e+00 : f32
    %16 = vector.broadcast %cst_14 : f32 to vector<16x16xf32>
    %17 = arith.subf %16, %15 : vector<16x16xf32>
    %18 = vector.extract_strided_slice %3 {offsets = [0, 0], sizes = [16, 16], strides = [1, 1]} : vector<16x32xf32> to vector<16x16xf32>
    %19 = arith.subf %18, %12 : vector<16x16xf32>
    %20 = arith.mulf %4, %19 : vector<16x16xf32>
    %21 = arith.addf %12, %20 : vector<16x16xf32>
    %22 = vector.extract_strided_slice %3 {offsets = [0, 16], sizes = [16, 16], strides = [1, 1]} : vector<16x32xf32> to vector<16x16xf32>
    %23 = arith.subf %22, %17 : vector<16x16xf32>
    %24 = arith.mulf %4, %23 : vector<16x16xf32>
    %25 = arith.addf %17, %24 : vector<16x16xf32>
    %c0_15 = arith.constant 0 : index
    %c0_16 = arith.constant 0 : index
    %c0_17 = arith.constant 0 : index
    %26 = vector.load %arg8[%c0_15, %c0_16, %c0_17] : memref<1x16x32xf32, #tpu.memory_space<vmem>>, vector<1x16x16xf32>
    %27 = vector.shape_cast %26 : vector<1x16x16xf32> to vector<16x16xf32>
    %28 = vector.shape_cast %21 : vector<16x16xf32> to vector<1x16x16xf32>
    tpu.vector_store %arg8[%c0_15, %c0_16, %c0_17], %28 {strides = array<i32>} : memref<1x16x32xf32, #tpu.memory_space<vmem>>, vector<1x16x16xf32>,
    %c0_18 = arith.constant 0 : index
    %c0_19 = arith.constant 0 : index
    %c16 = arith.constant 16 : index
    %29 = vector.load %arg8[%c0_18, %c0_19, %c16] : memref<1x16x32xf32, #tpu.memory_space<vmem>>, vector<1x16x16xf32>
    %30 = vector.shape_cast %29 : vector<1x16x16xf32> to vector<16x16xf32>
    %31 = vector.shape_cast %25 : vector<16x16xf32> to vector<1x16x16xf32>
    tpu.vector_store %arg8[%c0_18, %c0_19, %c16], %31 {strides = array<i32>} : memref<1x16x32xf32, #tpu.memory_space<vmem>>, vector<1x16x16xf32>,
    %c0_20 = arith.constant 0 : index
    %c0_21 = arith.constant 0 : index
    %c0_22 = arith.constant 0 : index
    %32 = vector.load %arg8[%c0_20, %c0_21, %c0_22] : memref<1x16x32xf32, #tpu.memory_space<vmem>>, vector<1x16x32xf32>
    %33 = vector.shape_cast %32 : vector<1x16x32xf32> to vector<16x32xf32>
    %cst_23 = arith.constant dense<0.000000e+00> : vector<32x32xf32>
    %34 = tpu.matmul %5, %33, %cst_23 {dimension_numbers = #tpu.dot_dimension_numbers<[1], [0], [0], [1], [0, 0, 1, 1], [], []>} : vector<32x16xf32>, vector<16x32xf32>, vector<32x32xf32> -> vector<32x32xf32>
    %35 = vector.extract_strided_slice %34 {offsets = [0, 0], sizes = [16, 16], strides = [1, 1]} : vector<32x32xf32> to vector<16x16xf32>
    %36 = vector.extract_strided_slice %34 {offsets = [16, 16], sizes = [16, 16], strides = [1, 1]} : vector<32x32xf32> to vector<16x16xf32>
    %37 = arith.subf %35, %36 : vector<16x16xf32>
    %c0_24 = arith.constant 0 : index
    %c0_25 = arith.constant 0 : index
    %38 = vector.load %arg9[%c0_24, %c0_25] : memref<16x32xf32, #tpu.memory_space<vmem>>, vector<16x16xf32>
    tpu.vector_store %arg9[%c0_24, %c0_25], %37 {strides = array<i32>} : memref<16x32xf32, #tpu.memory_space<vmem>>, vector<16x16xf32>,
    %39 = vector.extract_strided_slice %34 {offsets = [0, 16], sizes = [16, 16], strides = [1, 1]} : vector<32x32xf32> to vector<16x16xf32>
    %40 = vector.extract_strided_slice %34 {offsets = [16, 0], sizes = [16, 16], strides = [1, 1]} : vector<32x32xf32> to vector<16x16xf32>
    %41 = arith.addf %39, %40 : vector<16x16xf32>
    %c0_26 = arith.constant 0 : index
    %c16_27 = arith.constant 16 : index
    %42 = vector.load %arg9[%c0_26, %c16_27] : memref<16x32xf32, #tpu.memory_space<vmem>>, vector<16x16xf32>
    tpu.vector_store %arg9[%c0_26, %c16_27], %41 {strides = array<i32>} : memref<16x32xf32, #tpu.memory_space<vmem>>, vector<16x16xf32>,
    %c0_28 = arith.constant 0 : index
    %c0_29 = arith.constant 0 : index
    %43 = vector.load %arg9[%c0_28, %c0_29] : memref<16x32xf32, #tpu.memory_space<vmem>>, vector<16x32xf32>
    %cst_30 = arith.constant dense<0.000000e+00> : vector<16x16xf32>
    %44 = tpu.matmul %43, %7, %cst_30 {dimension_numbers = #tpu.dot_dimension_numbers<[1], [0], [0], [1], [0, 0, 1, 1], [], []>} : vector<16x32xf32>, vector<32x16xf32>, vector<16x16xf32> -> vector<16x16xf32>
    %c0_31 = arith.constant 0 : index
    %c0_32 = arith.constant 0 : index
    %c0_33 = arith.constant 0 : index
    %45 = vector.load %arg7[%c0_31, %c0_32, %c0_33] : memref<1x16x16xf32, #tpu.memory_space<vmem>>, vector<1x16x16xf32>
    %46 = vector.shape_cast %45 : vector<1x16x16xf32> to vector<16x16xf32>
    %47 = vector.shape_cast %44 : vector<16x16xf32> to vector<1x16x16xf32>
    tpu.vector_store %arg7[%c0_31, %c0_32, %c0_33], %47 {strides = array<i32>} : memref<1x16x16xf32, #tpu.memory_space<vmem>>, vector<1x16x16xf32>,
    return
  }
  func.func @transform_0(%arg0: i32) -> (i32, i32, i32) {
    %c0_i32 = arith.constant 0 : i32
    %c0_i32_0 = arith.constant 0 : i32
    %c0_i32_1 = arith.constant 0 : i32
    return %arg0, %c0_i32, %c0_i32_0 : i32, i32, i32
  }
  func.func @transform_1(%arg0: i32) -> (i32, i32, i32) {
    %c0_i32 = arith.constant 0 : i32
    %c0_i32_0 = arith.constant 0 : i32
    %c0_i32_1 = arith.constant 0 : i32
    return %arg0, %c0_i32, %c0_i32_0 : i32, i32, i32
  }
  func.func @transform_2(%arg0: i32) -> (i32, i32) {
    %c0_i32 = arith.constant 0 : i32
    %c0_i32_0 = arith.constant 0 : i32
    %c0_i32_1 = arith.constant 0 : i32
    return %c0_i32, %c0_i32_0 : i32, i32
  }
  func.func @transform_3(%arg0: i32) -> (i32, i32) {
    %c0_i32 = arith.constant 0 : i32
    %c0_i32_0 = arith.constant 0 : i32
    %c0_i32_1 = arith.constant 0 : i32
    return %c0_i32, %c0_i32_0 : i32, i32
  }
  func.func @transform_4(%arg0: i32) -> (i32, i32) {
    %c0_i32 = arith.constant 0 : i32
    %c0_i32_0 = arith.constant 0 : i32
    %c0_i32_1 = arith.constant 0 : i32
    return %c0_i32, %c0_i32_0 : i32, i32
  }
  func.func @transform_5(%arg0: i32) -> (i32, i32) {
    %c0_i32 = arith.constant 0 : i32
    %c0_i32_0 = arith.constant 0 : i32
    %c0_i32_1 = arith.constant 0 : i32
    return %c0_i32, %c0_i32_0 : i32, i32
  }
  func.func @transform_6(%arg0: i32) -> (i32, i32, i32) {
    %c0_i32 = arith.constant 0 : i32
    %c0_i32_0 = arith.constant 0 : i32
    %c0_i32_1 = arith.constant 0 : i32
    return %arg0, %c0_i32, %c0_i32_0 : i32, i32, i32
  }
  func.func @transform_7(%arg0: i32) -> (i32, i32, i32) {
    %c0_i32 = arith.constant 0 : i32
    %c0_i32_0 = arith.constant 0 : i32
    %c0_i32_1 = arith.constant 0 : i32
    return %arg0, %c0_i32, %c0_i32_0 : i32, i32, i32
  }
}

</mosaic_0001>

<llo_original>
// kernel: tpu_custom_call.1
$region0: #{tpu_custom_call.1}
  #allocation0 [shape = 'u32[]', space=smem, size = 0x4, offset = 0x4, fixed_abs, tag = 'smem constant byte address 0x4 - core index']
  #allocation1 [shape = 'u32[144,128]{1,0:T(1,128)}', space=vmem, size = 0x12000, scoped, tag = 'internal scratch']
  #allocation2 [shape = 'f32[16,32]{1,0:T(8,128)}', space=vmem, size = 0x2000, scoped, tag = 'scratch operand']
  %s0 = inlined_call_operand.vmem [shape: f32[2,16,16], index: 0, kind: input, shape index: {}]
  %s1 = inlined_call_operand.vmem [shape: f32[2,16,32], index: 1, kind: input, shape index: {}]
  %s2 = inlined_call_operand.vmem [shape: f32[16,16], index: 2, kind: input, shape index: {}]
  %s3 = inlined_call_operand.vmem [shape: f32[32,16], index: 3, kind: input, shape index: {}]
  %s4 = inlined_call_operand.vmem [shape: f32[16,32], index: 4, kind: input, shape index: {}]
  %s5 = inlined_call_operand.vmem [shape: f32[32,16], index: 5, kind: input, shape index: {}]
  %s6 = inlined_call_operand.hbm [shape: f32[2,16,16], index: 6, kind: output, shape index: {0}]
  %s7 = inlined_call_operand.hbm [shape: f32[2,16,32], index: 7, kind: output, shape index: {1}]
  %8 = xla_tuple %s6, %s7
  %s9 = sld [smem:[#allocation0]]
  $region65: #{tpu_custom_call.1} parent=0
    _
  %s11 = ssub.s32 1, %s9
  %s12 = scalar_select 0, %s11, %s9
  $region1: #{tpu_custom_call.1} parent=0
    #allocation3 [shape = 'u8[16384]{0}', space=vmem, size = 0x4000, scoped, tag = 'output window, operand 0']
    #allocation4 [shape = 's32[2]{0}', space=sflag, size = 0x8, scoped, tag = 'scoped memory for tpu_custom_call.1']
    #allocation5 [shape = 'u8[16384]{0}', space=vmem, size = 0x4000, scoped, tag = 'output window, operand 1']
    #allocation6 [shape = 's32[2]{0}', space=sflag, size = 0x8, scoped, tag = 'scoped memory for tpu_custom_call.1']
    %13 = vsyncpa [#allocation4], 0
    %s14 = scalar_lea.sflag [#allocation4], 1
    %15 = vsyncpa %s14, 0
    %16 = vsyncpa [#allocation6], 0
    %s17 = scalar_lea.sflag [#allocation6], 1
    %18 = vsyncpa %s17, 0
    loop: start=0, step=1, limit=4
    $region2: #{tpu_custom_call.1} parent=1 // loop_pre_header
      _
    $region3: #{tpu_custom_call.1} parent=1 // loop_header
      %s20 = sphi 0, %s24
      %p21 = scmp.ge.s32.totalorder %s20, 4
      %s30 = sphi 0, %s32
      %s33 = sphi 0, %s30
      %s34 = sphi 0, %s33
      %s50 = sphi 0, %s34
      %s56 = sphi 0, %s58
      %s59 = sphi 0, %s56
      %s60 = sphi 0, %s59
      %s76 = sphi 0, %s60
      %s80 = sphi 0, %s80
      %s82 = sphi 0, %s80
      %s83 = sphi 0, %s82
      %s97 = sphi 0, %s83
      %s101 = sphi 0, %s101
      %s103 = sphi 0, %s101
      %s104 = sphi 0, %s103
      %s118 = sphi 0, %s104
      %s122 = sphi 0, %s122
      %s124 = sphi 0, %s122
      %s125 = sphi 0, %s124
      %s139 = sphi 0, %s125
      %s143 = sphi 0, %s143
      %s145 = sphi 0, %s143
      %s146 = sphi 0, %s145
      %s160 = sphi 0, %s146
      %s166 = sphi 0, %s168
      %s169 = sphi 0, %s166
      %s170 = sphi 0, %s169
      %s186 = sphi 0, %s170
      %s192 = sphi 0, %s194
      %s195 = sphi 0, %s192
      %s196 = sphi 0, %s195
      %s212 = sphi 0, %s196
    $region4: #{tpu_custom_call.1} parent=1 // loop_header_branch
      %23 = sbr.rel (%p21) target = $region8
    $region5: #{tpu_custom_call.1} parent=1 // loop_body
      %s25 = ssub.s32 %s20, 1
      %s26 = ssub.s32 %s20, 2
      %s27 = sadd.s32 %s20, 1
      %s28 = ssub.s32 %s20, %s27
      %p29 = scmp.eq.s32.totalorder %s28, 0
      %s31 = sadd.s32 %s30, 1
      %s32 = scalar_select %p29, %s30, %s31
      %p35 = pneg %p29
      %p36 = scmp.eq.s32.totalorder %s20, 1
      %p37 = por %p35, %p36
      %p38 = scmp.ne.s32.totalorder %s30, %s33
      %p39 = scmp.eq.s32.totalorder %s20, 0
      %p40 = por %p38, %p39
      %p41 = scmp.ne.s32.totalorder %s30, %s33
      %p42 = scmp.eq.s32.totalorder %s25, 1
      %p43 = por %p41, %p42
      %p44 = scmp.ne.s32.totalorder %s33, %s34
      %p45 = scmp.eq.s32.totalorder %s25, 0
      %p46 = por %p44, %p45
      %p47 = scmp.ne.s32.totalorder %s33, %s34
      %p48 = scmp.eq.s32.totalorder %s26, 1
      %p49 = por %p47, %p48
      %p51 = scmp.ne.s32.totalorder %s34, %s50
      %p52 = scmp.eq.s32.totalorder %s26, 0
      %p53 = por %p51, %p52
      %s54 = ssub.s32 %s20, %s27
      %p55 = scmp.eq.s32.totalorder %s54, 0
      %s57 = sadd.s32 %s56, 1
      %s58 = scalar_select %p55, %s56, %s57
      %p61 = pneg %p55
      %p62 = scmp.eq.s32.totalorder %s20, 1
      %p63 = por %p61, %p62
      %p64 = scmp.ne.s32.totalorder %s56, %s59
      %p65 = scmp.eq.s32.totalorder %s20, 0
      %p66 = por %p64, %p65
      %p67 = scmp.ne.s32.totalorder %s56, %s59
      %p68 = scmp.eq.s32.totalorder %s25, 1
      %p69 = por %p67, %p68
      %p70 = scmp.ne.s32.totalorder %s59, %s60
      %p71 = scmp.eq.s32.totalorder %s25, 0
      %p72 = por %p70, %p71
      %p73 = scmp.ne.s32.totalorder %s59, %s60
      %p74 = scmp.eq.s32.totalorder %s26, 1
      %p75 = por %p73, %p74
      %p77 = scmp.ne.s32.totalorder %s60, %s76
      %p78 = scmp.eq.s32.totalorder %s26, 0
      %p79 = por %p77, %p78
      %s81 = sadd.s32 %s80, 1
      %p84 = scmp.eq.s32.totalorder %s20, 1
      %p85 = scmp.ne.s32.totalorder %s80, %s82
      %p86 = scmp.eq.s32.totalorder %s20, 0
      %p87 = por %p85, %p86
      %p88 = scmp.ne.s32.totalorder %s80, %s82
      %p89 = scmp.eq.s32.totalorder %s25, 1
      %p90 = por %p88, %p89
      %p91 = scmp.ne.s32.totalorder %s82, %s83
      %p92 = scmp.eq.s32.totalorder %s25, 0
      %p93 = por %p91, %p92
      %p94 = scmp.ne.s32.totalorder %s82, %s83
      %p95 = scmp.eq.s32.totalorder %s26, 1
      %p96 = por %p94, %p95
      %p98 = scmp.ne.s32.totalorder %s83, %s97
      %p99 = scmp.eq.s32.totalorder %s26, 0
      %p100 = por %p98, %p99
      %s102 = sadd.s32 %s101, 1
      %p105 = scmp.eq.s32.totalorder %s20, 1
      %p106 = scmp.ne.s32.totalorder %s101, %s103
      %p107 = scmp.eq.s32.totalorder %s20, 0
      %p108 = por %p106, %p107
      %p109 = scmp.ne.s32.totalorder %s101, %s103
      %p110 = scmp.eq.s32.totalorder %s25, 1
      %p111 = por %p109, %p110
      %p112 = scmp.ne.s32.totalorder %s103, %s104
      %p113 = scmp.eq.s32.totalorder %s25, 0
      %p114 = por %p112, %p113
      %p115 = scmp.ne.s32.totalorder %s103, %s104
      %p116 = scmp.eq.s32.totalorder %s26, 1
      %p117 = por %p115, %p116
      %p119 = scmp.ne.s32.totalorder %s104, %s118
      %p120 = scmp.eq.s32.totalorder %s26, 0
      %p121 = por %p119, %p120
      %s123 = sadd.s32 %s122, 1
      %p126 = scmp.eq.s32.totalorder %s20, 1
      %p127 = scmp.ne.s32.totalorder %s122, %s124
      %p128 = scmp.eq.s32.totalorder %s20, 0
      %p129 = por %p127, %p128
      %p130 = scmp.ne.s32.totalorder %s122, %s124
      %p131 = scmp.eq.s32.totalorder %s25, 1
      %p132 = por %p130, %p131
      %p133 = scmp.ne.s32.totalorder %s124, %s125
      %p134 = scmp.eq.s32.totalorder %s25, 0
      %p135 = por %p133, %p134
      %p136 = scmp.ne.s32.totalorder %s124, %s125
      %p137 = scmp.eq.s32.totalorder %s26, 1
      %p138 = por %p136, %p137
      %p140 = scmp.ne.s32.totalorder %s125, %s139
      %p141 = scmp.eq.s32.totalorder %s26, 0
      %p142 = por %p140, %p141
      %s144 = sadd.s32 %s143, 1
      %p147 = scmp.eq.s32.totalorder %s20, 1
      %p148 = scmp.ne.s32.totalorder %s143, %s145
      %p149 = scmp.eq.s32.totalorder %s20, 0
      %p150 = por %p148, %p149
      %p151 = scmp.ne.s32.totalorder %s143, %s145
      %p152 = scmp.eq.s32.totalorder %s25, 1
      %p153 = por %p151, %p152
      %p154 = scmp.ne.s32.totalorder %s145, %s146
      %p155 = scmp.eq.s32.totalorder %s25, 0
      %p156 = por %p154, %p155
      %p157 = scmp.ne.s32.totalorder %s145, %s146
      %p158 = scmp.eq.s32.totalorder %s26, 1
      %p159 = por %p157, %p158
      %p161 = scmp.ne.s32.totalorder %s146, %s160
      %p162 = scmp.eq.s32.totalorder %s26, 0
      %p163 = por %p161, %p162
      %s164 = ssub.s32 %s20, %s27
      %p165 = scmp.eq.s32.totalorder %s164, 0
      %s167 = sadd.s32 %s166, 1
      %s168 = scalar_select %p165, %s166, %s167
      %p171 = pneg %p165
      %p172 = scmp.eq.s32.totalorder %s20, 1
      %p173 = por %p171, %p172
      %p174 = scmp.ne.s32.totalorder %s166, %s169
      %p175 = scmp.eq.s32.totalorder %s20, 0
      %p176 = por %p174, %p175
      %p177 = scmp.ne.s32.totalorder %s166, %s169
      %p178 = scmp.eq.s32.totalorder %s25, 1
      %p179 = por %p177, %p178
      %p180 = scmp.ne.s32.totalorder %s169, %s170
      %p181 = scmp.eq.s32.totalorder %s25, 0
      %p182 = por %p180, %p181
      %p183 = scmp.ne.s32.totalorder %s169, %s170
      %p184 = scmp.eq.s32.totalorder %s26, 1
      %p185 = por %p183, %p184
      %p187 = scmp.ne.s32.totalorder %s170, %s186
      %p188 = scmp.eq.s32.totalorder %s26, 0
      %p189 = por %p187, %p188
      %s190 = ssub.s32 %s20, %s27
      %p191 = scmp.eq.s32.totalorder %s190, 0
      %s193 = sadd.s32 %s192, 1
      %s194 = scalar_select %p191, %s192, %s193
      %p197 = pneg %p191
      %p198 = scmp.eq.s32.totalorder %s20, 1
      %p199 = por %p197, %p198
      %p200 = scmp.ne.s32.totalorder %s192, %s195
      %p201 = scmp.eq.s32.totalorder %s20, 0
      %p202 = por %p200, %p201
      %p203 = scmp.ne.s32.totalorder %s192, %s195
      %p204 = scmp.eq.s32.totalorder %s25, 1
      %p205 = por %p203, %p204
      %p206 = scmp.ne.s32.totalorder %s195, %s196
      %p207 = scmp.eq.s32.totalorder %s25, 0
      %p208 = por %p206, %p207
      %p209 = scmp.ne.s32.totalorder %s195, %s196
      %p210 = scmp.eq.s32.totalorder %s26, 1
      %p211 = por %p209, %p210
      %p213 = scmp.ne.s32.totalorder %s196, %s212
      %p214 = scmp.eq.s32.totalorder %s26, 0
      %p215 = por %p213, %p214
      %p216 = scmp.le.s32.totalorder 1, %s20
      %p217 = scmp.lt.s32.totalorder %s20, 3
      %p218 = pnand %p216, %p217
      %p219 = pneg %p218
      // Predicated region
      $region9: #{tpu_custom_call.1} parent=5 // pred_check
        _
      $region10: #{tpu_custom_call.1} parent=5 // pred_check_branch
        %221 = sbr.rel (%p218) target = $region12
      $region11: #{tpu_custom_call.1} parent=5 // pred_region
        %s222 = ssub.s32 %s20, 1
        // Predicated region
        $region13: #{tpu_custom_call.1} parent=11 // pred_check
          %p223 = pneg %p93
        $region14: #{tpu_custom_call.1} parent=11 // pred_check_branch
          %225 = sbr.rel (%p223) target = $region16
        $region15: #{tpu_custom_call.1} parent=11 // pred_region
          _
        $region16: #{tpu_custom_call.1} parent=11 // pred_fallthru
          _
        // Predicated region
        $region17: #{tpu_custom_call.1} parent=11 // pred_check
          %p226 = pneg %p114
        $region18: #{tpu_custom_call.1} parent=11 // pred_check_branch
          %228 = sbr.rel (%p226) target = $region20
        $region19: #{tpu_custom_call.1} parent=11 // pred_region
          _
        $region20: #{tpu_custom_call.1} parent=11 // pred_fallthru
          _
        // Predicated region
        $region21: #{tpu_custom_call.1} parent=11 // pred_check
          %p229 = pneg %p135
        $region22: #{tpu_custom_call.1} parent=11 // pred_check_branch
          %231 = sbr.rel (%p229) target = $region24
        $region23: #{tpu_custom_call.1} parent=11 // pred_region
          _
        $region24: #{tpu_custom_call.1} parent=11 // pred_fallthru
          _
        // Predicated region
        $region25: #{tpu_custom_call.1} parent=11 // pred_check
          %p232 = pneg %p156
        $region26: #{tpu_custom_call.1} parent=11 // pred_check_branch
          %234 = sbr.rel (%p232) target = $region28
        $region27: #{tpu_custom_call.1} parent=11 // pred_region
          _
        $region28: #{tpu_custom_call.1} parent=11 // pred_fallthru
          _
      $region12: #{tpu_custom_call.1} parent=5 // pred_fallthru
        _
      %p235 = scmp.lt.s32.totalorder %s20, 2
      // Predicated region
      $region29: #{tpu_custom_call.1} parent=5 // pred_check
        %p236 = pneg %p235
      $region30: #{tpu_custom_call.1} parent=5 // pred_check_branch
        %238 = sbr.rel (%p236) target = $region32
      $region31: #{tpu_custom_call.1} parent=5 // pred_region
        // Predicated region
        $region33: #{tpu_custom_call.1} parent=31 // pred_check
          %p239 = pneg %p40
        $region34: #{tpu_custom_call.1} parent=31 // pred_check_branch
          %241 = sbr.rel (%p239) target = $region36
        $region35: #{tpu_custom_call.1} parent=31 // pred_region
          %p242 = scmp.lt.s32.totalorder %s20, 1
          %s243 = scalar_select %p242, %s20, 1
          %s244 = smul.addr %s243, 2
          %s245 = smul.addr %s244, 8
          %s246 = scalar_lea.vmem %s0, %s245
        $region36: #{tpu_custom_call.1} parent=31 // pred_fallthru
          _
        // Predicated region
        $region37: #{tpu_custom_call.1} parent=31 // pred_check
          %p247 = pneg %p66
        $region38: #{tpu_custom_call.1} parent=31 // pred_check_branch
          %249 = sbr.rel (%p247) target = $region40
        $region39: #{tpu_custom_call.1} parent=31 // pred_region
          %p250 = scmp.lt.s32.totalorder %s20, 1
          %s251 = scalar_select %p250, %s20, 1
          %s252 = smul.addr %s251, 2
          %s253 = smul.addr %s252, 8
          %s254 = scalar_lea.vmem %s1, %s253
        $region40: #{tpu_custom_call.1} parent=31 // pred_fallthru
          _
      $region32: #{tpu_custom_call.1} parent=5 // pred_fallthru
        _
      %p255 = scmp.le.s32.totalorder 1, %s20
      %p256 = scmp.lt.s32.totalorder %s20, 3
      %p257 = pnand %p255, %p256
      %p258 = pneg %p257
      // Predicated region
      $region41: #{tpu_custom_call.1} parent=5 // pred_check
        _
      $region42: #{tpu_custom_call.1} parent=5 // pred_check_branch
        %260 = sbr.rel (%p257) target = $region44
      $region43: #{tpu_custom_call.1} parent=5 // pred_region
        %s261 = ssub.s32 %s20, 1
        %p262 = scmp.lt.s32.totalorder %s25, 1
        %s263 = scalar_select %p262, %s25, 1
        %s264 = smul.addr %s263, 2
        %s265 = smul.addr %s264, 8
        %s266 = scalar_lea.vmem %s0, %s265
        %p267 = pneg %p46
        %p268 = pneg %p43
        %p269 = scmp.lt.s32.totalorder %s25, 1
        %s270 = scalar_select %p269, %s25, 1
        %s271 = smul.addr %s270, 2
        %s272 = smul.addr %s271, 8
        %s273 = scalar_lea.vmem %s1, %s272
        %p274 = pneg %p72
        %p275 = pneg %p69
        %p276 = pneg %p93
        %p277 = pneg %p90
        %p278 = pneg %p114
        %p279 = pneg %p111
        %p280 = pneg %p135
        %p281 = pneg %p132
        %p282 = pneg %p156
        %p283 = pneg %p153
        %p284 = pneg %p182
        %p285 = pneg %p179
        %s286 = sand.u32 %s169, 1
        %s287 = scalar_lea.sflag [#allocation4], %s286
        %s288 = sand.u32 %s169, 1
        %s289 = smul.addr %s288, 16
        %s290 = scalar_lea.vmem [#allocation3], %s289
        %p291 = pneg %p208
        %p292 = pneg %p205
        %s293 = sand.u32 %s195, 1
        %s294 = scalar_lea.sflag [#allocation6], %s293
        %s295 = sand.u32 %s195, 1
        %s296 = smul.addr %s295, 16
        %s297 = scalar_lea.vmem [#allocation5], %s296
        %p298 = scmp.lt.s32.totalorder %s25, 1
        %s299 = scalar_select %p298, %s25, 1
        %s300 = smul.addr %s299, 2
        %s301 = smul.addr %s300, 8
        %s302 = scalar_lea.vmem %s0, %s301
        %p303 = scmp.lt.s32.totalorder %s25, 1
        %s304 = scalar_select %p303, %s25, 1
        %s305 = smul.addr %s304, 2
        %s306 = smul.addr %s305, 8
        %s307 = scalar_lea.vmem %s1, %s306
        %v308 = vld [vmem:[%s302] sm:$0xff]
        %v309 = vld [vmem:[%s302 + $0x8] sm:$0xff]
        %v310 = vld [vmem:[%s307] sm:$0xff]
        %v311 = vld [vmem:[%s307 + $0x8] sm:$0xff]
        %v312 = vld [vmem:[%s2] sm:$0xff]
        %v313 = vld [vmem:[%s2 + $0x8] sm:$0xff]
        %v314 = vld [vmem:[%s3] sm:$0xff]
        %v315 = vld [vmem:[%s3 + $0x8] sm:$0xff]
        %v316 = vld [vmem:[%s3 + $0x10] sm:$0xff]
        %v317 = vld [vmem:[%s3 + $0x18] sm:$0xff]
        %v318 = vld [vmem:[%s4] sm:$0xff]
        %v319 = vld [vmem:[%s4 + $0x8] sm:$0xff]
        %v320 = vld [vmem:[%s5] sm:$0xff]
        %v321 = vld [vmem:[%s5 + $0x8] sm:$0xff]
        %v322 = vld [vmem:[%s5 + $0x10] sm:$0xff]
        %v323 = vld [vmem:[%s5 + $0x18] sm:$0xff]
        %vm324 = vcmask 130048
        %v326 = vsel %vm324, %v314, 0
        %v329 = vsel %vm324, %v315, 0
        %v332 = vsel %vm324, %v316, 0
        %v335 = vsel %vm324, %v317, 0
        %337 = vmatprep.subr.mxu0 0.0
        %338 = vmatpush1.msra.mxu0 0.0
        %339 = vmatprep.subr.mxu0 0.0
        %340 = vmatpush1.msra.mxu0 0.0
        %341 = vmatprep.subr.mxu0 0.0
        %342 = vmatpush1.msra.mxu0 0.0
        %343 = vmatprep.subr.mxu0 0.0
        %344 = vmatpush1.msra.mxu0 0.0
        %345 = vmatprep.subr.mxu0 0.0
        %346 = vmatpush1.msra.mxu0 0.0
        %347 = vmatprep.subr.mxu0 0.0
        %348 = vmatpush1.msra.mxu0 0.0
        %349 = vmatprep.subr.mxu0 0.0
        %350 = vmatpush1.msra.mxu0 0.0
        %351 = vmatprep.subr.mxu0 0.0
        %352 = vmatpush1.msra.mxu0 0.0
        %353 = vmatprep.subr.mxu0 0.0
        %354 = vmatpush1.msra.mxu0 0.0
        %355 = vmatprep.subr.mxu0 0.0
        %356 = vmatpush1.msra.mxu0 0.0
        %357 = vmatprep.subr.mxu0 0.0
        %358 = vmatpush1.msra.mxu0 0.0
        %359 = vmatprep.subr.mxu0 0.0
        %360 = vmatpush1.msra.mxu0 0.0
        %361 = vmatprep.subr.mxu0 0.0
        %362 = vmatpush1.msra.mxu0 0.0
        %363 = vmatprep.subr.mxu0 0.0
        %364 = vmatpush1.msra.mxu0 0.0
        %365 = vmatprep.subr.mxu0 0.0
        %366 = vmatpush1.msra.mxu0 %v309
        %367 = vmatprep.subr.mxu0 0.0
        %368 = vmatpush1.msra.mxu0 %v308
        %369 = vmatprep.subr.mxu0 0.0
        %370 = vmatpush2.msra.mxu0 0.0
        %371 = vmatprep.subr.mxu0 0.0
        %372 = vmatpush2.msra.mxu0 0.0
        %373 = vmatprep.subr.mxu0 0.0
        %374 = vmatpush2.msra.mxu0 0.0
        %375 = vmatprep.subr.mxu0 0.0
        %376 = vmatpush2.msra.mxu0 0.0
        %377 = vmatprep.subr.mxu0 0.0
        %378 = vmatpush2.msra.mxu0 0.0
        %379 = vmatprep.subr.mxu0 0.0
        %380 = vmatpush2.msra.mxu0 0.0
        %381 = vmatprep.subr.mxu0 0.0
        %382 = vmatpush2.msra.mxu0 0.0
        %383 = vmatprep.subr.mxu0 0.0
        %384 = vmatpush2.msra.mxu0 0.0
        %385 = vmatprep.subr.mxu0 0.0
        %386 = vmatpush2.msra.mxu0 0.0
        %387 = vmatprep.subr.mxu0 0.0
        %388 = vmatpush2.msra.mxu0 0.0
        %389 = vmatprep.subr.mxu0 0.0
        %390 = vmatpush2.msra.mxu0 0.0
        %391 = vmatprep.subr.mxu0 0.0
        %392 = vmatpush2.msra.mxu0 0.0
        %393 = vmatprep.subr.mxu0 0.0
        %394 = vmatpush2.msra.mxu0 0.0
        %395 = vmatprep.subr.mxu0 0.0
        %396 = vmatpush2.msra.mxu0 0.0
        %397 = vmatprep.subr.mxu0 0.0
        %398 = vmatpush2.msra.mxu0 0.0
        %399 = vmatprep.subr.mxu0 0.0
        %400 = vmatpush2.msra.mxu0 0.0
        %401 = vmatprep.mubr.f32.mxu0 0.0
        %402 = vmatmul.mubr.f32.gmra.mxu0 %v326
        %v403 = vpop.f32.mrf.mxu0
        %v404 = vadd.f32 0.0, %v403
        %v405 = vpop.f32.mrf.mxu0
        %406 = vmatprep.mubr.f32.mxu0 0.0
        %407 = vmatmul.mubr.f32.gmra.mxu0 %v329
        %v408 = vpop.f32.mrf.mxu0
        %v409 = vadd.f32 0.0, %v408
        %v410 = vpop.f32.mrf.mxu0
        %411 = vmatprep.mubr.f32.mxu0 0.0
        %412 = vmatmul.mubr.f32.gmra.mxu0 %v332
        %v413 = vpop.f32.mrf.mxu0
        %v414 = vadd.f32 0.0, %v413
        %v415 = vpop.f32.mrf.mxu0
        %416 = vmatprep.mubr.f32.mxu0 0.0
        %417 = vmatmul.mubr.f32.gmra.mxu0 %v335
        %v418 = vpop.f32.mrf.mxu0
        %v419 = vadd.f32 0.0, %v418
        %v420 = vpop.f32.mrf.mxu0
        %421 = vdwg.mxu0
        %v423 = vsel %vm324, %v404, 0
        %v426 = vsel %vm324, %v409, 0
        %v429 = vsel %vm324, %v414, 0
        %v432 = vsel %vm324, %v419, 0
        %434 = vmatprep.subr.mxu0 0.0
        %435 = vmatpush1.msra.mxu0 0.0
        %436 = vmatprep.subr.mxu0 0.0
        %437 = vmatpush1.msra.mxu0 0.0
        %438 = vmatprep.subr.mxu0 0.0
        %439 = vmatpush1.msra.mxu0 0.0
        %440 = vmatprep.subr.mxu0 0.0
        %441 = vmatpush1.msra.mxu0 0.0
        %442 = vmatprep.subr.mxu0 0.0
        %443 = vmatpush1.msra.mxu0 0.0
        %444 = vmatprep.subr.mxu0 0.0
        %445 = vmatpush1.msra.mxu0 0.0
        %446 = vmatprep.subr.mxu0 0.0
        %447 = vmatpush1.msra.mxu0 0.0
        %448 = vmatprep.subr.mxu0 0.0
        %449 = vmatpush1.msra.mxu0 0.0
        %450 = vmatprep.subr.mxu0 0.0
        %451 = vmatpush1.msra.mxu0 0.0
        %452 = vmatprep.subr.mxu0 0.0
        %453 = vmatpush1.msra.mxu0 0.0
        %454 = vmatprep.subr.mxu0 0.0
        %455 = vmatpush1.msra.mxu0 0.0
        %456 = vmatprep.subr.mxu0 0.0
        %457 = vmatpush1.msra.mxu0 0.0
        %458 = vmatprep.subr.mxu0 0.0
        %459 = vmatpush1.msra.mxu0 0.0
        %460 = vmatprep.subr.mxu0 0.0
        %461 = vmatpush1.msra.mxu0 0.0
        %462 = vmatprep.subr.mxu0 0.0
        %463 = vmatpush1.msra.mxu0 %v319
        %464 = vmatprep.subr.mxu0 0.0
        %465 = vmatpush1.msra.mxu0 %v318
        %466 = vmatprep.subr.mxu0 0.0
        %467 = vmatpush2.msra.mxu0 0.0
        %468 = vmatprep.subr.mxu0 0.0
        %469 = vmatpush2.msra.mxu0 0.0
        %470 = vmatprep.subr.mxu0 0.0
        %471 = vmatpush2.msra.mxu0 0.0
        %472 = vmatprep.subr.mxu0 0.0
        %473 = vmatpush2.msra.mxu0 0.0
        %474 = vmatprep.subr.mxu0 0.0
        %475 = vmatpush2.msra.mxu0 0.0
        %476 = vmatprep.subr.mxu0 0.0
        %477 = vmatpush2.msra.mxu0 0.0
        %478 = vmatprep.subr.mxu0 0.0
        %479 = vmatpush2.msra.mxu0 0.0
        %480 = vmatprep.subr.mxu0 0.0
        %481 = vmatpush2.msra.mxu0 0.0
        %482 = vmatprep.subr.mxu0 0.0
        %483 = vmatpush2.msra.mxu0 0.0
        %484 = vmatprep.subr.mxu0 0.0
        %485 = vmatpush2.msra.mxu0 0.0
        %486 = vmatprep.subr.mxu0 0.0
        %487 = vmatpush2.msra.mxu0 0.0
        %488 = vmatprep.subr.mxu0 0.0
        %489 = vmatpush2.msra.mxu0 0.0
        %490 = vmatprep.subr.mxu0 0.0
        %491 = vmatpush2.msra.mxu0 0.0
        %492 = vmatprep.subr.mxu0 0.0
        %493 = vmatpush2.msra.mxu0 0.0
        %494 = vmatprep.subr.mxu0 0.0
        %495 = vmatpush2.msra.mxu0 0.0
        %496 = vmatprep.subr.mxu0 0.0
        %497 = vmatpush2.msra.mxu0 0.0
        %498 = vmatprep.mubr.f32.mxu0 0.0
        %499 = vmatmul.mubr.f32.gmra.mxu0 %v423
        %v500 = vpop.f32.mrf.mxu0
        %v501 = vadd.f32 0.0, %v500
        %v502 = vpop.f32.mrf.mxu0
        %503 = vmatprep.mubr.f32.mxu0 0.0
        %504 = vmatmul.mubr.f32.gmra.mxu0 %v426
        %v505 = vpop.f32.mrf.mxu0
        %v506 = vadd.f32 0.0, %v505
        %v507 = vpop.f32.mrf.mxu0
        %508 = vmatprep.mubr.f32.mxu0 0.0
        %509 = vmatmul.mubr.f32.gmra.mxu0 %v429
        %v510 = vpop.f32.mrf.mxu0
        %v511 = vadd.f32 0.0, %v510
        %v512 = vpop.f32.mrf.mxu0
        %513 = vmatprep.mubr.f32.mxu0 0.0
        %514 = vmatmul.mubr.f32.gmra.mxu0 %v432
        %v515 = vpop.f32.mrf.mxu0
        %v516 = vadd.f32 0.0, %v515
        %v517 = vpop.f32.mrf.mxu0
        %518 = vdwg.mxu0
        %521 = vrot.lane.b32.xlu0 %v511, 112
        %v522 = vpop.permute.xlu0 %521
        %523 = vrot.lane.b32.xlu0 %v516, 112
        %v524 = vpop.permute.xlu0 %523
        %v527 = vsub.f32 %v501, %v522
        %v528 = vsub.f32 %v506, %v524
        %529 = vrot.lane.b32.xlu0 %v511, 16
        %v530 = vpop.permute.xlu0 %529
        %531 = vrot.lane.b32.xlu0 %v516, 16
        %v532 = vpop.permute.xlu0 %531
        %v535 = vadd.f32 %v501, %v530
        %v536 = vadd.f32 %v506, %v532
        %v537 = vsub.f32 0.0, %v535
        %v538 = vsub.f32 0.0, %v536
        %v539 = vsub.f32 %v310, %v527
        %v540 = vsub.f32 %v311, %v528
        %v541 = vmul.f32 %v312, %v539
        %v542 = vmul.f32 %v313, %v540
        %v543 = vadd.f32 %v527, %v541
        %v544 = vadd.f32 %v528, %v542
        %v545 = vsub.f32 %v310, %v537
        %v546 = vsub.f32 %v311, %v538
        %549 = vrot.lane.b32.xlu0 %v545, 112
        %v550 = vpop.permute.xlu0 %549
        %551 = vrot.lane.b32.xlu0 %v546, 112
        %v552 = vpop.permute.xlu0 %551
        %v555 = vmul.f32 %v312, %v550
        %v556 = vmul.f32 %v313, %v552
        %559 = vrot.lane.b32.xlu0 %v555, 16
        %v560 = vpop.permute.xlu0 %559
        %561 = vrot.lane.b32.xlu0 %v556, 16
        %v562 = vpop.permute.xlu0 %561
        %v565 = vadd.f32 %v537, %v560
        %v566 = vadd.f32 %v538, %v562
        %567 = vst.msk [vmem:[%s297] sm:$0xff] %vm324, %v543
        %568 = vst.msk [vmem:[%s297 + $0x8] sm:$0xff] %vm324, %v544
        %vm569 = vcmask 261248
        %570 = vst.msk [vmem:[%s297] sm:$0xff] %vm569, %v565
        %571 = vst.msk [vmem:[%s297 + $0x8] sm:$0xff] %vm569, %v566
        %v572 = vld [vmem:[%s297] sm:$0xff]
        %v573 = vld [vmem:[%s297 + $0x8] sm:$0xff]
        %574 = vmatprep.subr.mxu0 0.0
        %575 = vmatpush1.msra.mxu0 0.0
        %576 = vmatprep.subr.mxu0 0.0
        %577 = vmatpush1.msra.mxu0 0.0
        %578 = vmatprep.subr.mxu0 0.0
        %579 = vmatpush1.msra.mxu0 0.0
        %580 = vmatprep.subr.mxu0 0.0
        %581 = vmatpush1.msra.mxu0 0.0
        %582 = vmatprep.subr.mxu0 0.0
        %583 = vmatpush1.msra.mxu0 0.0
        %584 = vmatprep.subr.mxu0 0.0
        %585 = vmatpush1.msra.mxu0 0.0
        %586 = vmatprep.subr.mxu0 0.0
        %587 = vmatpush1.msra.mxu0 0.0
        %588 = vmatprep.subr.mxu0 0.0
        %589 = vmatpush1.msra.mxu0 0.0
        %590 = vmatprep.subr.mxu0 0.0
        %591 = vmatpush1.msra.mxu0 0.0
        %592 = vmatprep.subr.mxu0 0.0
        %593 = vmatpush1.msra.mxu0 0.0
        %594 = vmatprep.subr.mxu0 0.0
        %595 = vmatpush1.msra.mxu0 0.0
        %596 = vmatprep.subr.mxu0 0.0
        %597 = vmatpush1.msra.mxu0 0.0
        %598 = vmatprep.subr.mxu0 0.0
        %599 = vmatpush1.msra.mxu0 0.0
        %600 = vmatprep.subr.mxu0 0.0
        %601 = vmatpush1.msra.mxu0 0.0
        %602 = vmatprep.subr.mxu0 0.0
        %603 = vmatpush1.msra.mxu0 %v573
        %604 = vmatprep.subr.mxu0 0.0
        %605 = vmatpush1.msra.mxu0 %v572
        %606 = vmatprep.subr.mxu0 0.0
        %607 = vmatpush2.msra.mxu0 0.0
        %608 = vmatprep.subr.mxu0 0.0
        %609 = vmatpush2.msra.mxu0 0.0
        %610 = vmatprep.subr.mxu0 0.0
        %611 = vmatpush2.msra.mxu0 0.0
        %612 = vmatprep.subr.mxu0 0.0
        %613 = vmatpush2.msra.mxu0 0.0
        %614 = vmatprep.subr.mxu0 0.0
        %615 = vmatpush2.msra.mxu0 0.0
        %616 = vmatprep.subr.mxu0 0.0
        %617 = vmatpush2.msra.mxu0 0.0
        %618 = vmatprep.subr.mxu0 0.0
        %619 = vmatpush2.msra.mxu0 0.0
        %620 = vmatprep.subr.mxu0 0.0
        %621 = vmatpush2.msra.mxu0 0.0
        %622 = vmatprep.subr.mxu0 0.0
        %623 = vmatpush2.msra.mxu0 0.0
        %624 = vmatprep.subr.mxu0 0.0
        %625 = vmatpush2.msra.mxu0 0.0
        %626 = vmatprep.subr.mxu0 0.0
        %627 = vmatpush2.msra.mxu0 0.0
        %628 = vmatprep.subr.mxu0 0.0
        %629 = vmatpush2.msra.mxu0 0.0
        %630 = vmatprep.subr.mxu0 0.0
        %631 = vmatpush2.msra.mxu0 0.0
        %632 = vmatprep.subr.mxu0 0.0
        %633 = vmatpush2.msra.mxu0 0.0
        %634 = vmatprep.subr.mxu0 0.0
        %635 = vmatpush2.msra.mxu0 0.0
        %636 = vmatprep.subr.mxu0 0.0
        %637 = vmatpush2.msra.mxu0 0.0
        %638 = vmatprep.mubr.f32.mxu0 0.0
        %639 = vmatmul.mubr.f32.gmra.mxu0 %v326
        %v640 = vpop.f32.mrf.mxu0
        %v641 = vadd.f32 0.0, %v640
        %v642 = vpop.f32.mrf.mxu0
        %643 = vmatprep.mubr.f32.mxu0 0.0
        %644 = vmatmul.mubr.f32.gmra.mxu0 %v329
        %v645 = vpop.f32.mrf.mxu0
        %v646 = vadd.f32 0.0, %v645
        %v647 = vpop.f32.mrf.mxu0
        %648 = vmatprep.mubr.f32.mxu0 0.0
        %649 = vmatmul.mubr.f32.gmra.mxu0 %v332
        %v650 = vpop.f32.mrf.mxu0
        %v651 = vadd.f32 0.0, %v650
        %v652 = vpop.f32.mrf.mxu0
        %653 = vmatprep.mubr.f32.mxu0 0.0
        %654 = vmatmul.mubr.f32.gmra.mxu0 %v335
        %v655 = vpop.f32.mrf.mxu0
        %v656 = vadd.f32 0.0, %v655
        %v657 = vpop.f32.mrf.mxu0
        %658 = vdwg.mxu0
        %661 = vrot.lane.b32.xlu0 %v651, 112
        %v662 = vpop.permute.xlu0 %661
        %663 = vrot.lane.b32.xlu0 %v656, 112
        %v664 = vpop.permute.xlu0 %663
        %v667 = vsub.f32 %v641, %v662
        %v668 = vsub.f32 %v646, %v664
        %669 = vst.msk [vmem:[#allocation2] sm:$0xff] %vm324, %v667
        %670 = vst.msk [vmem:[#allocation2 + $0x8] sm:$0xff] %vm324, %v668
        %671 = vrot.lane.b32.xlu0 %v651, 16
        %v672 = vpop.permute.xlu0 %671
        %673 = vrot.lane.b32.xlu0 %v656, 16
        %v674 = vpop.permute.xlu0 %673
        %v677 = vadd.f32 %v641, %v672
        %v678 = vadd.f32 %v646, %v674
        %679 = vst.msk [vmem:[#allocation2] sm:$0xff] %vm569, %v677
        %680 = vst.msk [vmem:[#allocation2 + $0x8] sm:$0xff] %vm569, %v678
        %v681 = vld [vmem:[#allocation2] sm:$0xff]
        %v682 = vld [vmem:[#allocation2 + $0x8] sm:$0xff]
        %vm683 = vcmask 261120
        %v685 = vsel %vm683, %v681, 0
        %v688 = vsel %vm683, %v682, 0
        %690 = vmatprep.subr.mxu0 0.0
        %691 = vmatpush1.msra.mxu0 0.0
        %692 = vmatprep.subr.mxu0 0.0
        %693 = vmatpush1.msra.mxu0 0.0
        %694 = vmatprep.subr.mxu0 0.0
        %695 = vmatpush1.msra.mxu0 0.0
        %696 = vmatprep.subr.mxu0 0.0
        %697 = vmatpush1.msra.mxu0 0.0
        %698 = vmatprep.subr.mxu0 0.0
        %699 = vmatpush1.msra.mxu0 0.0
        %700 = vmatprep.subr.mxu0 0.0
        %701 = vmatpush1.msra.mxu0 0.0
        %702 = vmatprep.subr.mxu0 0.0
        %703 = vmatpush1.msra.mxu0 0.0
        %704 = vmatprep.subr.mxu0 0.0
        %705 = vmatpush1.msra.mxu0 0.0
        %706 = vmatprep.subr.mxu0 0.0
        %707 = vmatpush1.msra.mxu0 0.0
        %708 = vmatprep.subr.mxu0 0.0
        %709 = vmatpush1.msra.mxu0 0.0
        %710 = vmatprep.subr.mxu0 0.0
        %711 = vmatpush1.msra.mxu0 0.0
        %712 = vmatprep.subr.mxu0 0.0
        %713 = vmatpush1.msra.mxu0 0.0
        %714 = vmatprep.subr.mxu0 0.0
        %715 = vmatpush1.msra.mxu0 %v323
        %716 = vmatprep.subr.mxu0 0.0
        %717 = vmatpush1.msra.mxu0 %v322
        %718 = vmatprep.subr.mxu0 0.0
        %719 = vmatpush1.msra.mxu0 %v321
        %720 = vmatprep.subr.mxu0 0.0
        %721 = vmatpush1.msra.mxu0 %v320
        %722 = vmatprep.subr.mxu0 0.0
        %723 = vmatpush2.msra.mxu0 0.0
        %724 = vmatprep.subr.mxu0 0.0
        %725 = vmatpush2.msra.mxu0 0.0
        %726 = vmatprep.subr.mxu0 0.0
        %727 = vmatpush2.msra.mxu0 0.0
        %728 = vmatprep.subr.mxu0 0.0
        %729 = vmatpush2.msra.mxu0 0.0
        %730 = vmatprep.subr.mxu0 0.0
        %731 = vmatpush2.msra.mxu0 0.0
        %732 = vmatprep.subr.mxu0 0.0
        %733 = vmatpush2.msra.mxu0 0.0
        %734 = vmatprep.subr.mxu0 0.0
        %735 = vmatpush2.msra.mxu0 0.0
        %736 = vmatprep.subr.mxu0 0.0
        %737 = vmatpush2.msra.mxu0 0.0
        %738 = vmatprep.subr.mxu0 0.0
        %739 = vmatpush2.msra.mxu0 0.0
        %740 = vmatprep.subr.mxu0 0.0
        %741 = vmatpush2.msra.mxu0 0.0
        %742 = vmatprep.subr.mxu0 0.0
        %743 = vmatpush2.msra.mxu0 0.0
        %744 = vmatprep.subr.mxu0 0.0
        %745 = vmatpush2.msra.mxu0 0.0
        %746 = vmatprep.subr.mxu0 0.0
        %747 = vmatpush2.msra.mxu0 0.0
        %748 = vmatprep.subr.mxu0 0.0
        %749 = vmatpush2.msra.mxu0 0.0
        %750 = vmatprep.subr.mxu0 0.0
        %751 = vmatpush2.msra.mxu0 0.0
        %752 = vmatprep.subr.mxu0 0.0
        %753 = vmatpush2.msra.mxu0 0.0
        %754 = vmatprep.mubr.f32.mxu0 0.0
        %755 = vmatmul.mubr.f32.gmra.mxu0 %v685
        %v756 = vpop.f32.mrf.mxu0
        %v757 = vadd.f32 0.0, %v756
        %v758 = vpop.f32.mrf.mxu0
        %759 = vmatprep.mubr.f32.mxu0 0.0
        %760 = vmatmul.mubr.f32.gmra.mxu0 %v688
        %v761 = vpop.f32.mrf.mxu0
        %v762 = vadd.f32 0.0, %v761
        %v763 = vpop.f32.mrf.mxu0
        %764 = vdwg.mxu0
        %765 = vst.msk [vmem:[%s290] sm:$0xff] %vm324, %v757
        %766 = vst.msk [vmem:[%s290 + $0x8] sm:$0xff] %vm324, %v762
        %s767 = sand.u32 %s169, 1
        %s768 = scalar_lea.sflag [#allocation4], %s767
        %s769 = sand.u32 %s169, 1
        %s770 = smul.addr %s769, 16
        %s771 = scalar_lea.vmem [#allocation3], %s770
        %s772 = sand.u32 %s195, 1
        %s773 = scalar_lea.sflag [#allocation6], %s772
        %s774 = sand.u32 %s195, 1
        %s775 = smul.addr %s774, 16
        %s776 = scalar_lea.vmem [#allocation5], %s775
        // Predicated region
        $region45: #{tpu_custom_call.1} parent=43 // pred_check
          %p777 = pneg %p179
        $region46: #{tpu_custom_call.1} parent=43 // pred_check_branch
          %779 = sbr.rel (%p777) target = $region48
        $region47: #{tpu_custom_call.1} parent=43 // pred_region
          %s781 = ssub.s32 256, 256
          %782 = vsyncadd %s768, %s781
          %s783 = smul.addr %s25, 2
          %s784 = smul.addr %s783, 128
          %s785 = scalar_lea.hbm %s6, %s784
          %s786 = sshll.u32 %s771, 4
          %s787 = int_to_ptr.vmem [resolvable:$true] %s786
          %792 = dma.vmem_to_hbm [thread:$0]  %s787, 256, %s785, %s768, 128, 128, 8
        $region48: #{tpu_custom_call.1} parent=43 // pred_fallthru
          _
        // Predicated region
        $region49: #{tpu_custom_call.1} parent=43 // pred_check
          %p793 = pneg %p205
        $region50: #{tpu_custom_call.1} parent=43 // pred_check_branch
          %795 = sbr.rel (%p793) target = $region52
        $region51: #{tpu_custom_call.1} parent=43 // pred_region
          %s797 = ssub.s32 256, 256
          %798 = vsyncadd %s773, %s797
          %s799 = smul.addr %s25, 2
          %s800 = smul.addr %s799, 128
          %s801 = scalar_lea.hbm %s7, %s800
          %s802 = sshll.u32 %s776, 4
          %s803 = int_to_ptr.vmem [resolvable:$true] %s802
          %808 = dma.vmem_to_hbm [thread:$0]  %s803, 256, %s801, %s773, 128, 128, 8
        $region52: #{tpu_custom_call.1} parent=43 // pred_fallthru
          _
      $region44: #{tpu_custom_call.1} parent=5 // pred_fallthru
        _
      %p809 = scmp.le.s32.totalorder 2, %s20
      // Predicated region
      $region53: #{tpu_custom_call.1} parent=5 // pred_check
        %p810 = pneg %p809
      $region54: #{tpu_custom_call.1} parent=5 // pred_check_branch
        %812 = sbr.rel (%p810) target = $region56
      $region55: #{tpu_custom_call.1} parent=5 // pred_region
        %s813 = ssub.s32 %s20, 2
        // Predicated region
        $region57: #{tpu_custom_call.1} parent=55 // pred_check
          %p814 = pneg %p185
        $region58: #{tpu_custom_call.1} parent=55 // pred_check_branch
          %816 = sbr.rel (%p814) target = $region60
        $region59: #{tpu_custom_call.1} parent=55 // pred_region
          %s817 = sand.u32 %s170, 1
          %s818 = scalar_lea.sflag [#allocation4], %s817
          %s819 = sand.u32 %s170, 1
          %s820 = smul.addr %s819, 16
          %s821 = scalar_lea.vmem [#allocation3], %s820
          %822 = dma.done %s818, 256
        $region60: #{tpu_custom_call.1} parent=55 // pred_fallthru
          _
        // Predicated region
        $region61: #{tpu_custom_call.1} parent=55 // pred_check
          %p823 = pneg %p211
        $region62: #{tpu_custom_call.1} parent=55 // pred_check_branch
          %825 = sbr.rel (%p823) target = $region64
        $region63: #{tpu_custom_call.1} parent=55 // pred_region
          %s826 = sand.u32 %s196, 1
          %s827 = scalar_lea.sflag [#allocation6], %s826
          %s828 = sand.u32 %s196, 1
          %s829 = smul.addr %s828, 16
          %s830 = scalar_lea.vmem [#allocation5], %s829
          %831 = dma.done %s827, 256
        $region64: #{tpu_custom_call.1} parent=55 // pred_fallthru
          _
      $region56: #{tpu_custom_call.1} parent=5 // pred_fallthru
        _
    $region6: #{tpu_custom_call.1} parent=1 // loop_footer
      %s24 = sadd.s32 1, %s20
    $region7: #{tpu_custom_call.1} parent=1 // loop_footer_branch
      %19 = sbr.rel target = $region3
    $region8: #{tpu_custom_call.1} parent=1 // loop_exit
      _
    %832 = vsyncpa [#allocation4], 1
    %s833 = scalar_lea.sflag [#allocation4], 1
    %834 = vsyncpa %s833, 1
    %835 = vsyncpa [#allocation6], 1
    %s836 = scalar_lea.sflag [#allocation6], 1
    %837 = vsyncpa %s836, 1

</llo_original>
